<compile_context>
chip_gen: v6e
topology: v6e:2x2x1
jax: 0.10.0
libtpu: 0.0.40
codegen_flags: <defaults>
</compile_context>

<pallas_src>
import jax
import jax.numpy as jnp
from jax.experimental import pallas as pl
from jax.experimental.pallas import tpu as pltpu


def _time_embedding_kernel(x_ref, w1_ref, b1_ref, w2_ref, b2_ref, o_ref):
    # Layer 1: (TB, D) @ (D, H) on the MXU, f32 accumulation, f32 bias.
    # x arrives in its original dtype; cast to the weight dtype (bf16) in-kernel
    # (x's DMA is tiny, so no separate wrapper-side cast op is needed).
    x = x_ref[...].astype(w1_ref.dtype)
    h = jnp.dot(x, w1_ref[...], preferred_element_type=jnp.float32) + b1_ref[...]
    # SiLU in f32: sigmoid runs on the EUP slot, the multiply on the VPU.
    h = h * jax.nn.sigmoid(h)
    # Layer 2: (TB, H) @ (H, HN) -- bf16 operands, f32 accumulation, f32 bias.
    # Note: padded tail rows of a partial batch tile flow through sigmoid on
    # undefined data; the results are discarded on writeback (benign).
    y = jnp.dot(h.astype(w2_ref.dtype), w2_ref[...],
                preferred_element_type=jnp.float32) + b2_ref[...]
    o_ref[...] = y.astype(o_ref.dtype)


def prepare_time_embedding_params(w1, b1, w2, b2, *, param_dtype=jnp.bfloat16):
    """One-time (init) conversion from the PyTorch nn.Linear layout.

    w1: (4n, n), b1: (4n,), w2: (4n, 4n), b2: (4n,)  ->
    contraction-major bf16 weights and (1, H) f32 bias rows, so the per-call
    forward path contains no transposes or dtype-conversion launches.
    """
    H, D = w1.shape
    assert w2.shape == (H, H) and b1.shape == (H,) and b2.shape == (H,)
    w1_cm = jnp.asarray(w1).T.astype(param_dtype)        # (D, H)
    w2_cm = jnp.asarray(w2).T.astype(param_dtype)        # (H, H)
    b1_r = jnp.asarray(b1).reshape(1, H).astype(jnp.float32)
    b2_r = jnp.asarray(b2).reshape(1, H).astype(jnp.float32)
    return w1_cm, b1_r, w2_cm, b2_r


def time_embedding(x, w1_cm, b1_r, w2_cm, b2_r, *, block_b=None):
    """Fused TimeEmbedding forward.

    x    : (B, n_embd)
    w1_cm: (n_embd, H)  contraction-major, H = 4*n_embd
    b1_r : (1, H) f32
    w2_cm: (H, H)       contraction-major
    b2_r : (1, H) f32
    returns (B, H) in x.dtype
    """
    B, D = x.shape
    H = w1_cm.shape[1]
    assert w1_cm.shape == (D, H) and w2_cm.shape == (H, H)
    assert b1_r.shape == (1, H) and b2_r.shape == (1, H)

    # Batch tile: whole batch when it fits, otherwise 512-row tiles (multiple of
    # 8 sublanes; in bf16 the per-step working set still fits all generations).
    if block_b is None:
        block_b = B if B <= 512 else 512
    nb = pl.cdiv(B, block_b)

    # Column-split layer 2 across a second parallel grid axis only when the
    # batch axis has a single tile (the typical diffusion B=1-2 case): gives
    # v7x's second TensorCore the other half of w2's DMA + matmul. At large B
    # the batch tiles already parallelize, so skip the layer-1 recompute.
    nj = 2 if (nb == 1 and H % 256 == 0) else 1
    hn = H // nj

    # Constant-index blocks stay VMEM-resident; single-buffer them (no point
    # double-buffering a block whose index never changes).
    const_buf = pl.Buffered(1)
    w2_mode = const_buf if nj == 1 else None   # varies with j when column-split

    grid = (nj, nb)  # j outer / i inner: w2 block is reused across batch tiles.

    return pl.pallas_call(
        _time_embedding_kernel,
        out_shape=jax.ShapeDtypeStruct((B, H), x.dtype),
        grid=grid,
        in_specs=[
            pl.BlockSpec((block_b, D), lambda j, i: (i, 0)),                 # x tile
            pl.BlockSpec((D, H), lambda j, i: (0, 0),
                         pipeline_mode=const_buf),                           # w1
            pl.BlockSpec((1, H), lambda j, i: (0, 0),
                         pipeline_mode=const_buf),                           # b1
            pl.BlockSpec((H, hn), lambda j, i: (0, j),
                         pipeline_mode=w2_mode),                             # w2 cols
            pl.BlockSpec((1, hn), lambda j, i: (0, j),
                         pipeline_mode=w2_mode),                             # b2 cols
        ],
        out_specs=pl.BlockSpec((block_b, hn), lambda j, i: (i, j)),
        compiler_params=pltpu.CompilerParams(
            # Both axes are independent -> megacore / v7x 2-TC sharding.
            dimension_semantics=("parallel", "parallel"),
            # Explicit scoped-VMEM limit: above v5e's 16 MiB default, safely
            # under v7x's 64 MiB physical.
            vmem_limit_bytes=32 * 1024 * 1024),
    )(x, w1_cm, b1_r, w2_cm, b2_r)


# ----------------------------------------------------------------------------
# Pure-JAX f32 reference (same semantics as the PyTorch module).
# ----------------------------------------------------------------------------
def reference_forward(x, w1, b1, w2, b2):
    h = x @ w1.T + b1
    h = h * jax.nn.sigmoid(h)
    return h @ w2.T + b2


if __name__ == "__main__":
    # Small shapes consistent with the module; 4*n_embd = 512 is lane-dense and
    # divisible by 256, so the v7x column split is exercised.
    B, n_embd = 2, 128
    H = 4 * n_embd

    key = jax.random.PRNGKey(0)
    k0, k1, k2, k3, k4 = jax.random.split(key, 5)
    x = jax.random.normal(k0, (B, n_embd), dtype=jnp.float32)
    w1 = jax.random.normal(k1, (H, n_embd), dtype=jnp.float32) * 0.05
    b1 = jax.random.normal(k2, (H,), dtype=jnp.float32) * 0.05
    w2 = jax.random.normal(k3, (H, H), dtype=jnp.float32) * 0.05
    b2 = jax.random.normal(k4, (H,), dtype=jnp.float32) * 0.05

    # One-time init-side layout + dtype conversion (outside the forward path).
    params = prepare_time_embedding_params(w1, b1, w2, b2)

    out = jax.block_until_ready(time_embedding(x, *params))
    ref = reference_forward(x, w1, b1, w2, b2)

    assert out.shape == (B, H)
    max_err = float(jnp.max(jnp.abs(out - ref)))
    # bf16 weights/activations vs. a full-f32 reference -> relaxed tolerance.
    assert max_err < 5e-2, max_err
    print("KERNEL_OK")
</pallas_src>

<mosaic_0001>
module attributes {stable_mosaic.version = 11 : i64} {
  func.func @_time_embedding_kernel(%arg0: i32, %arg1: i32, %arg2: memref<2x128xf32, #tpu.memory_space<vmem>>, %arg3: memref<128x512xbf16, #tpu.memory_space<vmem>>, %arg4: memref<1x512xf32, #tpu.memory_space<vmem>>, %arg5: memref<512x256xbf16, #tpu.memory_space<vmem>>, %arg6: memref<1x256xf32, #tpu.memory_space<vmem>>, %arg7: memref<2x256xf32, #tpu.memory_space<vmem>>) attributes {dimension_semantics = [#tpu.dimension_semantics<parallel>, #tpu.dimension_semantics<parallel>], iteration_bounds = array<i64: 2, 1>, scalar_prefetch = 0 : i64, scratch_operands = 0 : i64, tpu.core_type = #tpu.core_type<tc>, window_params = [{transform_indices = @transform_0, window_bounds = array<i64: 2, 128>}, {pipeline_mode = #tpu.pipeline_mode<synchronous>, transform_indices = @transform_1, window_bounds = array<i64: 128, 512>}, {pipeline_mode = #tpu.pipeline_mode<synchronous>, transform_indices = @transform_2, window_bounds = array<i64: 1, 512>}, {transform_indices = @transform_3, window_bounds = array<i64: 512, 256>}, {transform_indices = @transform_4, window_bounds = array<i64: 1, 256>}, {transform_indices = @transform_5, window_bounds = array<i64: 2, 256>}]} {
    %c0 = arith.constant 0 : index
    %c0_0 = arith.constant 0 : index
    %0 = vector.load %arg2[%c0, %c0_0] : memref<2x128xf32, #tpu.memory_space<vmem>>, vector<2x128xf32>
    %1 = arith.truncf %0 : vector<2x128xf32> to vector<2x128xbf16>
    %c0_1 = arith.constant 0 : index
    %c0_2 = arith.constant 0 : index
    %2 = vector.load %arg3[%c0_1, %c0_2] : memref<128x512xbf16, #tpu.memory_space<vmem>>, vector<128x512xbf16>
    %cst = arith.constant dense<0.000000e+00> : vector<2x512xf32>
    %3 = tpu.matmul %1, %2, %cst {dimension_numbers = #tpu.dot_dimension_numbers<[1], [0], [0], [1], [0, 0, 1, 1], [], []>} : vector<2x128xbf16>, vector<128x512xbf16>, vector<2x512xf32> -> vector<2x512xf32>
    %c0_3 = arith.constant 0 : index
    %c0_4 = arith.constant 0 : index
    %4 = vector.load %arg4[%c0_3, %c0_4] : memref<1x512xf32, #tpu.memory_space<vmem>>, vector<1x512xf32>
    %5 = vector.broadcast %4 : vector<1x512xf32> to vector<2x512xf32>
    %6 = arith.addf %3, %5 : vector<2x512xf32>
    %7 = arith.negf %6 : vector<2x512xf32>
    %8 = math.exp %7 : vector<2x512xf32>
    %cst_5 = arith.constant 1.000000e+00 : f32
    %9 = vector.broadcast %cst_5 : f32 to vector<2x512xf32>
    %10 = arith.addf %9, %8 : vector<2x512xf32>
    %11 = arith.divf %9, %10 : vector<2x512xf32>
    %12 = arith.mulf %6, %11 : vector<2x512xf32>
    %13 = arith.truncf %12 : vector<2x512xf32> to vector<2x512xbf16>
    %c0_6 = arith.constant 0 : index
    %c0_7 = arith.constant 0 : index
    %14 = vector.load %arg5[%c0_6, %c0_7] : memref<512x256xbf16, #tpu.memory_space<vmem>>, vector<512x256xbf16>
    %cst_8 = arith.constant dense<0.000000e+00> : vector<2x256xf32>
    %15 = tpu.matmul %13, %14, %cst_8 {dimension_numbers = #tpu.dot_dimension_numbers<[1], [0], [0], [1], [0, 0, 1, 1], [], []>} : vector<2x512xbf16>, vector<512x256xbf16>, vector<2x256xf32> -> vector<2x256xf32>
    %c0_9 = arith.constant 0 : index
    %c0_10 = arith.constant 0 : index
    %16 = vector.load %arg6[%c0_9, %c0_10] : memref<1x256xf32, #tpu.memory_space<vmem>>, vector<1x256xf32>
    %17 = vector.broadcast %16 : vector<1x256xf32> to vector<2x256xf32>
    %18 = arith.addf %15, %17 : vector<2x256xf32>
    %c0_11 = arith.constant 0 : index
    %c0_12 = arith.constant 0 : index
    %19 = vector.load %arg7[%c0_11, %c0_12] : memref<2x256xf32, #tpu.memory_space<vmem>>, vector<2x256xf32>
    tpu.vector_store %arg7[%c0_11, %c0_12], %18 {strides = array<i32>} : memref<2x256xf32, #tpu.memory_space<vmem>>, vector<2x256xf32>,
    return
  }
  func.func @transform_0(%arg0: i32, %arg1: i32) -> (i32, i32) {
    %c0_i32 = arith.constant 0 : i32
    %c0_i32_0 = arith.constant 0 : i32
    return %arg1, %c0_i32 : i32, i32
  }
  func.func @transform_1(%arg0: i32, %arg1: i32) -> (i32, i32) {
    %c0_i32 = arith.constant 0 : i32
    %c0_i32_0 = arith.constant 0 : i32
    %c0_i32_1 = arith.constant 0 : i32
    return %c0_i32, %c0_i32_0 : i32, i32
  }
  func.func @transform_2(%arg0: i32, %arg1: i32) -> (i32, i32) {
    %c0_i32 = arith.constant 0 : i32
    %c0_i32_0 = arith.constant 0 : i32
    %c0_i32_1 = arith.constant 0 : i32
    return %c0_i32, %c0_i32_0 : i32, i32
  }
  func.func @transform_3(%arg0: i32, %arg1: i32) -> (i32, i32) {
    %c0_i32 = arith.constant 0 : i32
    %c0_i32_0 = arith.constant 0 : i32
    return %c0_i32, %arg0 : i32, i32
  }
  func.func @transform_4(%arg0: i32, %arg1: i32) -> (i32, i32) {
    %c0_i32 = arith.constant 0 : i32
    %c0_i32_0 = arith.constant 0 : i32
    return %c0_i32, %arg0 : i32, i32
  }
  func.func @transform_5(%arg0: i32, %arg1: i32) -> (i32, i32) {
    %c0_i32 = arith.constant 0 : i32
    return %arg1, %arg0 : i32, i32
  }
}

</mosaic_0001>

<llo_original>
// kernel: tpu_custom_call.1
$region0: #{tpu_custom_call.1}
  #allocation0 [shape = 'u32[]', space=smem, size = 0x4, offset = 0x4, fixed_abs, tag = 'smem constant byte address 0x4 - core index']
  #allocation1 [shape = 'u32[144,128]{1,0:T(1,128)}', space=vmem, size = 0x12000, scoped, tag = 'internal scratch']
  %s0 = inlined_call_operand.hbm [shape: f32[2,128], index: 0, kind: input, shape index: {}]
  %s1 = inlined_call_operand.hbm [shape: bf16[128,512], index: 1, kind: input, shape index: {}]
  %s2 = inlined_call_operand.hbm [shape: f32[1,512], index: 2, kind: input, shape index: {}]
  %s3 = inlined_call_operand.hbm [shape: bf16[512,512], index: 3, kind: input, shape index: {}]
  %s4 = inlined_call_operand.vmem [shape: f32[1,512], index: 4, kind: input, shape index: {}]
  %s5 = inlined_call_operand.hbm [shape: f32[2,512], index: 5, kind: output, shape index: {}]
  %s6 = sld [smem:[#allocation0]]
  $region69: #{tpu_custom_call.1} parent=0
    _
  %s8 = ssub.s32 1, %s6
  %s9 = scalar_select 0, %s8, %s6
  $region1: #{tpu_custom_call.1} parent=0
    #allocation2 [shape = 'u8[1024]{0}', space=vmem, size = 0x400, scoped, tag = 'input window, operand 0, single buffered']
    #allocation3 [shape = 's32[2]{0}', space=sflag, size = 0x8, scoped, tag = 'scoped memory for tpu_custom_call.1']
    #allocation4 [shape = 's32[2]{0}', space=sflag, size = 0x8, scoped, tag = 'scoped memory for tpu_custom_call.1']
    #allocation5 [shape = 'u8[131072]{0}', space=vmem, size = 0x20000, scoped, tag = 'input window, operand 1, single buffered']
    #allocation6 [shape = 's32[1]{0}', space=sflag, size = 0x4, scoped, tag = 'scoped memory for tpu_custom_call.1']
    #allocation7 [shape = 'u8[2048]{0}', space=vmem, size = 0x800, scoped, tag = 'input window, operand 2, single buffered']
    #allocation8 [shape = 'u8[524288]{0}', space=vmem, size = 0x80000, scoped, tag = 'input window, operand 3']
    #allocation9 [shape = 's32[2]{0}', space=sflag, size = 0x8, scoped, tag = 'scoped memory for tpu_custom_call.1']
    #allocation10 [shape = 'u8[4096]{0}', space=vmem, size = 0x1000, scoped, tag = 'output window, operand 0']
    %10 = vsyncpa [#allocation3], 0
    %11 = vsyncpa [#allocation6], 0
    %12 = vsyncpa [#allocation9], 0
    %s13 = scalar_lea.sflag [#allocation9], 1
    %14 = vsyncpa %s13, 0
    %15 = vsyncpa [#allocation4], 0
    %s16 = scalar_lea.sflag [#allocation4], 1
    %17 = vsyncpa %s16, 0
    loop: start=0, step=1, limit=4
    $region2: #{tpu_custom_call.1} parent=1 // loop_pre_header
      _
    $region3: #{tpu_custom_call.1} parent=1 // loop_header
      %s19 = sphi 0, %s23
      %p20 = scmp.ge.s32.totalorder %s19, 4
      %s26 = sphi 0, %s38
      %s27 = sphi 0, %s34
      %s28 = sphi 0, %s26
      %s29 = sphi 0, %s27
      %s30 = sphi 0, %s28
      %s31 = sphi 0, %s29
      %s41 = sphi 0, %s43
      %s44 = sphi 0, %s41
      %s45 = sphi 0, %s44
      %s61 = sphi 0, %s45
      %s65 = sphi 0, %s65
      %s67 = sphi 0, %s65
      %s68 = sphi 0, %s67
      %s82 = sphi 0, %s68
      %s86 = sphi 0, %s86
      %s88 = sphi 0, %s86
      %s89 = sphi 0, %s88
      %s103 = sphi 0, %s89
      %s109 = sphi 0, %s111
      %s112 = sphi 0, %s109
      %s113 = sphi 0, %s112
      %s129 = sphi 0, %s113
      %s135 = sphi 0, %s137
      %s138 = sphi 0, %s135
      %s139 = sphi 0, %s138
      %s155 = sphi 0, %s139
      %s163 = sphi 0, %s165
      %s166 = sphi 0, %s163
      %s167 = sphi 0, %s166
      %s183 = sphi 0, %s167
    $region4: #{tpu_custom_call.1} parent=1 // loop_header_branch
      %22 = sbr.rel (%p20) target = $region8
    $region5: #{tpu_custom_call.1} parent=1 // loop_body
      %s24 = ssub.s32 %s19, 1
      %s25 = ssub.s32 %s19, 2
      %s32 = sadd.s32 1, %s27
      %p33 = scmp.ge.s32.totalorder %s32, 1
      %s34 = scalar_select %p33, 0, %s32
      %s35 = sadd.s32 1, %s26
      %s36 = scalar_select %p33, %s35, %s26
      %p37 = scmp.ge.s32.totalorder %s36, 2
      %s38 = scalar_select %p37, 0, %s36
      %s39 = ssub.s32 %s27, %s34
      %p40 = scmp.eq.s32.totalorder %s39, 0
      %s42 = sadd.s32 %s41, 1
      %s43 = scalar_select %p40, %s41, %s42
      %p46 = pneg %p40
      %p47 = scmp.eq.s32.totalorder %s19, 1
      %p48 = por %p46, %p47
      %p49 = scmp.ne.s32.totalorder %s41, %s44
      %p50 = scmp.eq.s32.totalorder %s19, 0
      %p51 = por %p49, %p50
      %p52 = scmp.ne.s32.totalorder %s41, %s44
      %p53 = scmp.eq.s32.totalorder %s24, 1
      %p54 = por %p52, %p53
      %p55 = scmp.ne.s32.totalorder %s44, %s45
      %p56 = scmp.eq.s32.totalorder %s24, 0
      %p57 = por %p55, %p56
      %p58 = scmp.ne.s32.totalorder %s44, %s45
      %p59 = scmp.eq.s32.totalorder %s25, 1
      %p60 = por %p58, %p59
      %p62 = scmp.ne.s32.totalorder %s45, %s61
      %p63 = scmp.eq.s32.totalorder %s25, 0
      %p64 = por %p62, %p63
      %s66 = sadd.s32 %s65, 1
      %p69 = scmp.eq.s32.totalorder %s19, 1
      %p70 = scmp.ne.s32.totalorder %s65, %s67
      %p71 = scmp.eq.s32.totalorder %s19, 0
      %p72 = por %p70, %p71
      %p73 = scmp.ne.s32.totalorder %s65, %s67
      %p74 = scmp.eq.s32.totalorder %s24, 1
      %p75 = por %p73, %p74
      %p76 = scmp.ne.s32.totalorder %s67, %s68
      %p77 = scmp.eq.s32.totalorder %s24, 0
      %p78 = por %p76, %p77
      %p79 = scmp.ne.s32.totalorder %s67, %s68
      %p80 = scmp.eq.s32.totalorder %s25, 1
      %p81 = por %p79, %p80
      %p83 = scmp.ne.s32.totalorder %s68, %s82
      %p84 = scmp.eq.s32.totalorder %s25, 0
      %p85 = por %p83, %p84
      %s87 = sadd.s32 %s86, 1
      %p90 = scmp.eq.s32.totalorder %s19, 1
      %p91 = scmp.ne.s32.totalorder %s86, %s88
      %p92 = scmp.eq.s32.totalorder %s19, 0
      %p93 = por %p91, %p92
      %p94 = scmp.ne.s32.totalorder %s86, %s88
      %p95 = scmp.eq.s32.totalorder %s24, 1
      %p96 = por %p94, %p95
      %p97 = scmp.ne.s32.totalorder %s88, %s89
      %p98 = scmp.eq.s32.totalorder %s24, 0
      %p99 = por %p97, %p98
      %p100 = scmp.ne.s32.totalorder %s88, %s89
      %p101 = scmp.eq.s32.totalorder %s25, 1
      %p102 = por %p100, %p101
      %p104 = scmp.ne.s32.totalorder %s89, %s103
      %p105 = scmp.eq.s32.totalorder %s25, 0
      %p106 = por %p104, %p105
      %s107 = ssub.s32 %s26, %s38
      %p108 = scmp.eq.s32.totalorder %s107, 0
      %s110 = sadd.s32 %s109, 1
      %s111 = scalar_select %p108, %s109, %s110
      %p114 = pneg %p108
      %p115 = scmp.eq.s32.totalorder %s19, 1
      %p116 = por %p114, %p115
      %p117 = scmp.ne.s32.totalorder %s109, %s112
      %p118 = scmp.eq.s32.totalorder %s19, 0
      %p119 = por %p117, %p118
      %p120 = scmp.ne.s32.totalorder %s109, %s112
      %p121 = scmp.eq.s32.totalorder %s24, 1
      %p122 = por %p120, %p121
      %p123 = scmp.ne.s32.totalorder %s112, %s113
      %p124 = scmp.eq.s32.totalorder %s24, 0
      %p125 = por %p123, %p124
      %p126 = scmp.ne.s32.totalorder %s112, %s113
      %p127 = scmp.eq.s32.totalorder %s25, 1
      %p128 = por %p126, %p127
      %p130 = scmp.ne.s32.totalorder %s113, %s129
      %p131 = scmp.eq.s32.totalorder %s25, 0
      %p132 = por %p130, %p131
      %s133 = ssub.s32 %s26, %s38
      %p134 = scmp.eq.s32.totalorder %s133, 0
      %s136 = sadd.s32 %s135, 1
      %s137 = scalar_select %p134, %s135, %s136
      %p140 = pneg %p134
      %p141 = scmp.eq.s32.totalorder %s19, 1
      %p142 = por %p140, %p141
      %p143 = scmp.ne.s32.totalorder %s135, %s138
      %p144 = scmp.eq.s32.totalorder %s19, 0
      %p145 = por %p143, %p144
      %p146 = scmp.ne.s32.totalorder %s135, %s138
      %p147 = scmp.eq.s32.totalorder %s24, 1
      %p148 = por %p146, %p147
      %p149 = scmp.ne.s32.totalorder %s138, %s139
      %p150 = scmp.eq.s32.totalorder %s24, 0
      %p151 = por %p149, %p150
      %p152 = scmp.ne.s32.totalorder %s138, %s139
      %p153 = scmp.eq.s32.totalorder %s25, 1
      %p154 = por %p152, %p153
      %p156 = scmp.ne.s32.totalorder %s139, %s155
      %p157 = scmp.eq.s32.totalorder %s25, 0
      %p158 = por %p156, %p157
      %s159 = ssub.s32 %s27, %s34
      %s160 = ssub.s32 %s26, %s38
      %s161 = sor.u32 %s159, %s160
      %p162 = scmp.eq.s32.totalorder %s161, 0
      %s164 = sadd.s32 %s163, 1
      %s165 = scalar_select %p162, %s163, %s164
      %p168 = pneg %p162
      %p169 = scmp.eq.s32.totalorder %s19, 1
      %p170 = por %p168, %p169
      %p171 = scmp.ne.s32.totalorder %s163, %s166
      %p172 = scmp.eq.s32.totalorder %s19, 0
      %p173 = por %p171, %p172
      %p174 = scmp.ne.s32.totalorder %s163, %s166
      %p175 = scmp.eq.s32.totalorder %s24, 1
      %p176 = por %p174, %p175
      %p177 = scmp.ne.s32.totalorder %s166, %s167
      %p178 = scmp.eq.s32.totalorder %s24, 0
      %p179 = por %p177, %p178
      %p180 = scmp.ne.s32.totalorder %s166, %s167
      %p181 = scmp.eq.s32.totalorder %s25, 1
      %p182 = por %p180, %p181
      %p184 = scmp.ne.s32.totalorder %s167, %s183
      %p185 = scmp.eq.s32.totalorder %s25, 0
      %p186 = por %p184, %p185
      %p187 = scmp.le.s32.totalorder 1, %s19
      %p188 = scmp.lt.s32.totalorder %s19, 3
      %p189 = pnand %p187, %p188
      %p190 = pneg %p189
      // Predicated region
      $region9: #{tpu_custom_call.1} parent=5 // pred_check
        _
      $region10: #{tpu_custom_call.1} parent=5 // pred_check_branch
        %192 = sbr.rel (%p189) target = $region12
      $region11: #{tpu_custom_call.1} parent=5 // pred_region
        %s193 = ssub.s32 %s19, 1
        // Predicated region
        $region13: #{tpu_custom_call.1} parent=11 // pred_check
          %p194 = pneg %p57
        $region14: #{tpu_custom_call.1} parent=11 // pred_check_branch
          %196 = sbr.rel (%p194) target = $region16
        $region15: #{tpu_custom_call.1} parent=11 // pred_region
          %s198 = ssub.s32 32, 32
          %199 = vsyncadd [#allocation3], %s198
          %s200 = smul.addr %s29, 32
          %s201 = scalar_lea.hbm %s0, %s200
          %s203 = sshll.u32 [#allocation2], 4
          %s204 = int_to_ptr.vmem [resolvable:$true] %s203
          %206 = dma.hbm_to_vmem [thread:$0]  %s201, 32, %s204, [#allocation3]
        $region16: #{tpu_custom_call.1} parent=11 // pred_fallthru
          _
        // Predicated region
        $region17: #{tpu_custom_call.1} parent=11 // pred_check
          %p207 = pneg %p78
        $region18: #{tpu_custom_call.1} parent=11 // pred_check_branch
          %209 = sbr.rel (%p207) target = $region20
        $region19: #{tpu_custom_call.1} parent=11 // pred_region
          %s211 = ssub.s32 4096, 4096
          %212 = vsyncadd [#allocation6], %s211
          %s213 = sshll.u32 [#allocation5], 4
          %s214 = int_to_ptr.vmem [resolvable:$true] %s213
          %219 = dma.hbm_to_vmem [thread:$0]  %s1, 4096, %s214, [#allocation6], 256, 256, 16
        $region20: #{tpu_custom_call.1} parent=11 // pred_fallthru
          _
        // Predicated region
        $region21: #{tpu_custom_call.1} parent=11 // pred_check
          %p220 = pneg %p99
        $region22: #{tpu_custom_call.1} parent=11 // pred_check_branch
          %222 = sbr.rel (%p220) target = $region24
        $region23: #{tpu_custom_call.1} parent=11 // pred_region
          %s224 = ssub.s32 64, 64
          %225 = vsyncadd [#allocation6], %s224
          %s227 = sshll.u32 [#allocation7], 4
          %s228 = int_to_ptr.vmem [resolvable:$true] %s227
          %230 = dma.hbm_to_vmem [thread:$0]  %s2, 64, %s228, [#allocation6]
        $region24: #{tpu_custom_call.1} parent=11 // pred_fallthru
          _
      $region12: #{tpu_custom_call.1} parent=5 // pred_fallthru
        _
      %p231 = scmp.lt.s32.totalorder %s19, 2
      // Predicated region
      $region25: #{tpu_custom_call.1} parent=5 // pred_check
        %p232 = pneg %p231
      $region26: #{tpu_custom_call.1} parent=5 // pred_check_branch
        %234 = sbr.rel (%p232) target = $region28
      $region27: #{tpu_custom_call.1} parent=5 // pred_region
        // Predicated region
        $region29: #{tpu_custom_call.1} parent=27 // pred_check
          %p235 = pneg %p119
        $region30: #{tpu_custom_call.1} parent=27 // pred_check_branch
          %237 = sbr.rel (%p235) target = $region32
        $region31: #{tpu_custom_call.1} parent=27 // pred_region
          %s238 = sand.u32 %s109, 1
          %s239 = scalar_lea.sflag [#allocation9], %s238
          %s240 = sand.u32 %s109, 1
          %s241 = smul.addr %s240, 512
          %s242 = scalar_lea.vmem [#allocation8], %s241
          %s243 = smul.u32 2, %s26
          %s245 = ssub.s32 8192, 8192
          %246 = vsyncadd %s239, %s245
          %s247 = smul.addr %s243, 64
          %s248 = scalar_lea.hbm %s3, %s247
          %s249 = sshll.u32 %s242, 4
          %s250 = int_to_ptr.vmem [resolvable:$true] %s249
          %255 = dma.hbm_to_vmem [thread:$0]  %s248, 8192, %s250, %s239, 256, 128, 8
        $region32: #{tpu_custom_call.1} parent=27 // pred_fallthru
          _
        // Predicated region
        $region33: #{tpu_custom_call.1} parent=27 // pred_check
          %p256 = pneg %p145
        $region34: #{tpu_custom_call.1} parent=27 // pred_check_branch
          %258 = sbr.rel (%p256) target = $region36
        $region35: #{tpu_custom_call.1} parent=27 // pred_region
          %s259 = smul.u32 2, %s26
          %p260 = scmp.lt.s32.totalorder %s259, 3
          %s261 = scalar_select %p260, %s259, 3
          %s262 = scalar_lea.vmem %s4, %s261
          %s263 = smul.u32 2, %s26
        $region36: #{tpu_custom_call.1} parent=27 // pred_fallthru
          _
      $region28: #{tpu_custom_call.1} parent=5 // pred_fallthru
        _
      %p264 = scmp.le.s32.totalorder 1, %s19
      %p265 = scmp.lt.s32.totalorder %s19, 3
      %p266 = pnand %p264, %p265
      %p267 = pneg %p266
      // Predicated region
      $region37: #{tpu_custom_call.1} parent=5 // pred_check
        _
      $region38: #{tpu_custom_call.1} parent=5 // pred_check_branch
        %269 = sbr.rel (%p266) target = $region40
      $region39: #{tpu_custom_call.1} parent=5 // pred_region
        %s270 = ssub.s32 %s19, 1
        // Predicated region
        $region41: #{tpu_custom_call.1} parent=39 // pred_check
          %p271 = pneg %p57
        $region42: #{tpu_custom_call.1} parent=39 // pred_check_branch
          %273 = sbr.rel (%p271) target = $region44
        $region43: #{tpu_custom_call.1} parent=39 // pred_region
          %274 = dma.done [#allocation3], 32
        $region44: #{tpu_custom_call.1} parent=39 // pred_fallthru
          _
        // Predicated region
        $region45: #{tpu_custom_call.1} parent=39 // pred_check
          %p275 = pneg %p78
        $region46: #{tpu_custom_call.1} parent=39 // pred_check_branch
          %277 = sbr.rel (%p275) target = $region48
        $region47: #{tpu_custom_call.1} parent=39 // pred_region
          %278 = dma.done [#allocation6], 4096
        $region48: #{tpu_custom_call.1} parent=39 // pred_fallthru
          _
        // Predicated region
        $region49: #{tpu_custom_call.1} parent=39 // pred_check
          %p279 = pneg %p99
        $region50: #{tpu_custom_call.1} parent=39 // pred_check_branch
          %281 = sbr.rel (%p279) target = $region52
        $region51: #{tpu_custom_call.1} parent=39 // pred_region
          %282 = dma.done [#allocation6], 64
        $region52: #{tpu_custom_call.1} parent=39 // pred_fallthru
          _
        %s283 = sand.u32 %s112, 1
        %s284 = scalar_lea.sflag [#allocation9], %s283
        %s285 = sand.u32 %s112, 1
        %s286 = smul.addr %s285, 512
        %s287 = scalar_lea.vmem [#allocation8], %s286
        // Predicated region
        $region53: #{tpu_custom_call.1} parent=39 // pred_check
          %p288 = pneg %p125
        $region54: #{tpu_custom_call.1} parent=39 // pred_check_branch
          %290 = sbr.rel (%p288) target = $region56
        $region55: #{tpu_custom_call.1} parent=39 // pred_region
          %291 = dma.done %s284, 8192
        $region56: #{tpu_custom_call.1} parent=39 // pred_fallthru
          _
        %p292 = pneg %p57
        %p293 = pneg %p54
        %p294 = pneg %p78
        %p295 = pneg %p75
        %p296 = pneg %p99
        %p297 = pneg %p96
        %s298 = sand.u32 %s112, 1
        %s299 = scalar_lea.sflag [#allocation9], %s298
        %s300 = sand.u32 %s112, 1
        %s301 = smul.addr %s300, 512
        %s302 = scalar_lea.vmem [#allocation8], %s301
        %p303 = pneg %p125
        %p304 = pneg %p122
        %s305 = smul.u32 2, %s28
        %p306 = scmp.lt.s32.totalorder %s305, 3
        %s307 = scalar_select %p306, %s305, 3
        %s308 = scalar_lea.vmem %s4, %s307
        %p309 = pneg %p151
        %p310 = pneg %p148
        %p311 = pneg %p179
        %p312 = pneg %p176
        %s313 = sand.u32 %s166, 1
        %s314 = scalar_lea.sflag [#allocation4], %s313
        %s315 = sand.u32 %s166, 1
        %s316 = smul.addr %s315, 4
        %s317 = scalar_lea.vmem [#allocation10], %s316
        %s318 = smul.u32 2, %s28
        %s319 = smul.u32 2, %s28
        %p320 = scmp.lt.s32.totalorder %s319, 3
        %s321 = scalar_select %p320, %s319, 3
        %s322 = scalar_lea.vmem %s4, %s321
        %s323 = smul.u32 2, %s28
        %s324 = smul.u32 2, %s28
        %v326 = vld [vmem:[#allocation2] sm:$0x3]
        %v327 = vpack.c.bf16 %v326, %v326
        %v328 = vld [vmem:[#allocation5] sm:$0xff]
        %v329 = vld [vmem:[#allocation5 + $0x8] sm:$0xff]
        %v330 = vld [vmem:[#allocation5 + $0x10] sm:$0xff]
        %v331 = vld [vmem:[#allocation5 + $0x18] sm:$0xff]
        %v332 = vld [vmem:[#allocation5 + $0x20] sm:$0xff]
        %v333 = vld [vmem:[#allocation5 + $0x28] sm:$0xff]
        %v334 = vld [vmem:[#allocation5 + $0x30] sm:$0xff]
        %v335 = vld [vmem:[#allocation5 + $0x38] sm:$0xff]
        %v336 = vld [vmem:[#allocation5 + $0x40] sm:$0xff]
        %v337 = vld [vmem:[#allocation5 + $0x48] sm:$0xff]
        %v338 = vld [vmem:[#allocation5 + $0x50] sm:$0xff]
        %v339 = vld [vmem:[#allocation5 + $0x58] sm:$0xff]
        %v340 = vld [vmem:[#allocation5 + $0x60] sm:$0xff]
        %v341 = vld [vmem:[#allocation5 + $0x68] sm:$0xff]
        %v342 = vld [vmem:[#allocation5 + $0x70] sm:$0xff]
        %v343 = vld [vmem:[#allocation5 + $0x78] sm:$0xff]
        %v344 = vld [vmem:[#allocation5 + $0x80] sm:$0xff]
        %v345 = vld [vmem:[#allocation5 + $0x88] sm:$0xff]
        %v346 = vld [vmem:[#allocation5 + $0x90] sm:$0xff]
        %v347 = vld [vmem:[#allocation5 + $0x98] sm:$0xff]
        %v348 = vld [vmem:[#allocation5 + $0xa0] sm:$0xff]
        %v349 = vld [vmem:[#allocation5 + $0xa8] sm:$0xff]
        %v350 = vld [vmem:[#allocation5 + $0xb0] sm:$0xff]
        %v351 = vld [vmem:[#allocation5 + $0xb8] sm:$0xff]
        %v352 = vld [vmem:[#allocation5 + $0xc0] sm:$0xff]
        %v353 = vld [vmem:[#allocation5 + $0xc8] sm:$0xff]
        %v354 = vld [vmem:[#allocation5 + $0xd0] sm:$0xff]
        %v355 = vld [vmem:[#allocation5 + $0xd8] sm:$0xff]
        %v356 = vld [vmem:[#allocation5 + $0xe0] sm:$0xff]
        %v357 = vld [vmem:[#allocation5 + $0xe8] sm:$0xff]
        %v358 = vld [vmem:[#allocation5 + $0xf0] sm:$0xff]
        %v359 = vld [vmem:[#allocation5 + $0xf8] sm:$0xff]
        %v360 = vld [vmem:[#allocation7] sm:$0xf]
        %v362 = vlaneseq
        %v363 = vshrl.u32 %v362, 7
        %v364 = vsub.s32 0, %v363
        %v365 = vrot.slane %v360, %v364
        %v366 = vlaneseq
        %v367 = vshrl.u32 %v366, 7
        %v368 = vsub.s32 1, %v367
        %v369 = vrot.slane %v360, %v368
        %v370 = vlaneseq
        %v371 = vshrl.u32 %v370, 7
        %v372 = vsub.s32 2, %v371
        %v373 = vrot.slane %v360, %v372
        %v374 = vlaneseq
        %v375 = vshrl.u32 %v374, 7
        %v376 = vsub.s32 3, %v375
        %v377 = vrot.slane %v360, %v376
        %v414 = vunpack.c.l.b16 %v328
        %v415 = vunpack.c.h.b16 %v328
        %v416 = vunpack.c.l.b16 %v329
        %v417 = vunpack.c.h.b16 %v329
        %v418 = vunpack.c.l.b16 %v330
        %v419 = vunpack.c.h.b16 %v330
        %v420 = vunpack.c.l.b16 %v331
        %v421 = vunpack.c.h.b16 %v331
        %v422 = vunpack.c.l.b16 %v332
        %v423 = vunpack.c.h.b16 %v332
        %v424 = vunpack.c.l.b16 %v333
        %v425 = vunpack.c.h.b16 %v333
        %v426 = vunpack.c.l.b16 %v334
        %v427 = vunpack.c.h.b16 %v334
        %v428 = vunpack.c.l.b16 %v335
        %v429 = vunpack.c.h.b16 %v335
        %v430 = vunpack.c.l.b16 %v336
        %v431 = vunpack.c.h.b16 %v336
        %v432 = vunpack.c.l.b16 %v337
        %v433 = vunpack.c.h.b16 %v337
        %v434 = vunpack.c.l.b16 %v338
        %v435 = vunpack.c.h.b16 %v338
        %v436 = vunpack.c.l.b16 %v339
        %v437 = vunpack.c.h.b16 %v339
        %v438 = vunpack.c.l.b16 %v340
        %v439 = vunpack.c.h.b16 %v340
        %v440 = vunpack.c.l.b16 %v341
        %v441 = vunpack.c.h.b16 %v341
        %v442 = vunpack.c.l.b16 %v342
        %v443 = vunpack.c.h.b16 %v342
        %v444 = vunpack.c.l.b16 %v343
        %v445 = vunpack.c.h.b16 %v343
        %v446 = vunpack.c.l.b16 %v344
        %v447 = vunpack.c.h.b16 %v344
        %v448 = vunpack.c.l.b16 %v345
        %v449 = vunpack.c.h.b16 %v345
        %v450 = vunpack.c.l.b16 %v346
        %v451 = vunpack.c.h.b16 %v346
        %v452 = vunpack.c.l.b16 %v347
        %v453 = vunpack.c.h.b16 %v347
        %v454 = vunpack.c.l.b16 %v348
        %v455 = vunpack.c.h.b16 %v348
        %v456 = vunpack.c.l.b16 %v349
        %v457 = vunpack.c.h.b16 %v349
        %v458 = vunpack.c.l.b16 %v350
        %v459 = vunpack.c.h.b16 %v350
        %v460 = vunpack.c.l.b16 %v351
        %v461 = vunpack.c.h.b16 %v351
        %v462 = vunpack.c.l.b16 %v352
        %v463 = vunpack.c.h.b16 %v352
        %v464 = vunpack.c.l.b16 %v353
        %v465 = vunpack.c.h.b16 %v353
        %v466 = vunpack.c.l.b16 %v354
        %v467 = vunpack.c.h.b16 %v354
        %v468 = vunpack.c.l.b16 %v355
        %v469 = vunpack.c.h.b16 %v355
        %v470 = vunpack.c.l.b16 %v356
        %v471 = vunpack.c.h.b16 %v356
        %v472 = vunpack.c.l.b16 %v357
        %v473 = vunpack.c.h.b16 %v357
        %v474 = vunpack.c.l.b16 %v358
        %v475 = vunpack.c.h.b16 %v358
        %v476 = vunpack.c.l.b16 %v359
        %v477 = vunpack.c.h.b16 %v359
        %v478 = vpack.c.b16 %v418, %v414
        %v479 = vpack.c.b16 %v419, %v415
        %v480 = vpack.c.b16 %v420, %v416
        %v481 = vpack.c.b16 %v421, %v417
        %v482 = vpack.c.b16 %v426, %v422
        %v483 = vpack.c.b16 %v427, %v423
        %v484 = vpack.c.b16 %v428, %v424
        %v485 = vpack.c.b16 %v429, %v425
        %v486 = vpack.c.b16 %v434, %v430
        %v487 = vpack.c.b16 %v435, %v431
        %v488 = vpack.c.b16 %v436, %v432
        %v489 = vpack.c.b16 %v437, %v433
        %v490 = vpack.c.b16 %v442, %v438
        %v491 = vpack.c.b16 %v443, %v439
        %v492 = vpack.c.b16 %v444, %v440
        %v493 = vpack.c.b16 %v445, %v441
        %v494 = vpack.c.b16 %v450, %v446
        %v495 = vpack.c.b16 %v451, %v447
        %v496 = vpack.c.b16 %v452, %v448
        %v497 = vpack.c.b16 %v453, %v449
        %v498 = vpack.c.b16 %v458, %v454
        %v499 = vpack.c.b16 %v459, %v455
        %v500 = vpack.c.b16 %v460, %v456
        %v501 = vpack.c.b16 %v461, %v457
        %v502 = vpack.c.b16 %v466, %v462
        %v503 = vpack.c.b16 %v467, %v463
        %v504 = vpack.c.b16 %v468, %v464
        %v505 = vpack.c.b16 %v469, %v465
        %v506 = vpack.c.b16 %v474, %v470
        %v507 = vpack.c.b16 %v475, %v471
        %v508 = vpack.c.b16 %v476, %v472
        %v509 = vpack.c.b16 %v477, %v473
        %542 = vmatprep.subr.bf16.mxu0 %v507
        %543 = vmatpush1.bf16.msra.mxu0 %v506
        %544 = vmatprep.subr.bf16.mxu0 %v503
        %545 = vmatpush1.bf16.msra.mxu0 %v502
        %546 = vmatprep.subr.bf16.mxu0 %v499
        %547 = vmatpush1.bf16.msra.mxu0 %v498
        %548 = vmatprep.subr.bf16.mxu0 %v495
        %549 = vmatpush1.bf16.msra.mxu0 %v494
        %550 = vmatprep.subr.bf16.mxu0 %v491
        %551 = vmatpush1.bf16.msra.mxu0 %v490
        %552 = vmatprep.subr.bf16.mxu0 %v487
        %553 = vmatpush1.bf16.msra.mxu0 %v486
        %554 = vmatprep.subr.bf16.mxu0 %v483
        %555 = vmatpush1.bf16.msra.mxu0 %v482
        %556 = vmatprep.subr.bf16.mxu0 %v479
        %557 = vmatpush1.bf16.msra.mxu0 %v478
        %558 = vmatprep.subr.bf16.mxu0 0
        %559 = vmatpush2.bf16.msra.mxu0 0
        %560 = vmatprep.subr.bf16.mxu0 0
        %561 = vmatpush2.bf16.msra.mxu0 0
        %562 = vmatprep.subr.bf16.mxu0 0
        %563 = vmatpush2.bf16.msra.mxu0 0
        %564 = vmatprep.subr.bf16.mxu0 0
        %565 = vmatpush2.bf16.msra.mxu0 0
        %566 = vmatprep.subr.bf16.mxu0 0
        %567 = vmatpush2.bf16.msra.mxu0 0
        %568 = vmatprep.subr.bf16.mxu0 0
        %569 = vmatpush2.bf16.msra.mxu0 0
        %570 = vmatprep.subr.bf16.mxu0 0
        %571 = vmatpush2.bf16.msra.mxu0 0
        %572 = vmatprep.subr.bf16.mxu0 0
        %573 = vmatpush2.bf16.msra.mxu0 0
        %574 = vmatprep.mubr.bf16.mxu0 0
        %575 = vmatmul.mubr.bf16.gmra.mxu0 %v327
        %v576 = vpop.f32.mrf.mxu0
        %v577 = vadd.f32 %v365, %v576
        %v578 = vpop.f32.mrf.mxu0
        %v579 = vadd.f32 %v369, %v578
        %v580 = vpop.f32.mrf.mxu0
        %v581 = vpop.f32.mrf.mxu0
        %582 = vdwg.mxu0
        %583 = vmatprep.subr.bf16.mxu0 %v509
        %584 = vmatpush1.bf16.msra.mxu0 %v508
        %585 = vmatprep.subr.bf16.mxu0 %v505
        %586 = vmatpush1.bf16.msra.mxu0 %v504
        %587 = vmatprep.subr.bf16.mxu0 %v501
        %588 = vmatpush1.bf16.msra.mxu0 %v500
        %589 = vmatprep.subr.bf16.mxu0 %v497
        %590 = vmatpush1.bf16.msra.mxu0 %v496
        %591 = vmatprep.subr.bf16.mxu0 %v493
        %592 = vmatpush1.bf16.msra.mxu0 %v492
        %593 = vmatprep.subr.bf16.mxu0 %v489
        %594 = vmatpush1.bf16.msra.mxu0 %v488
        %595 = vmatprep.subr.bf16.mxu0 %v485
        %596 = vmatpush1.bf16.msra.mxu0 %v484
        %597 = vmatprep.subr.bf16.mxu0 %v481
        %598 = vmatpush1.bf16.msra.mxu0 %v480
        %599 = vmatprep.subr.bf16.mxu0 0
        %600 = vmatpush2.bf16.msra.mxu0 0
        %601 = vmatprep.subr.bf16.mxu0 0
        %602 = vmatpush2.bf16.msra.mxu0 0
        %603 = vmatprep.subr.bf16.mxu0 0
        %604 = vmatpush2.bf16.msra.mxu0 0
        %605 = vmatprep.subr.bf16.mxu0 0
        %606 = vmatpush2.bf16.msra.mxu0 0
        %607 = vmatprep.subr.bf16.mxu0 0
        %608 = vmatpush2.bf16.msra.mxu0 0
        %609 = vmatprep.subr.bf16.mxu0 0
        %610 = vmatpush2.bf16.msra.mxu0 0
        %611 = vmatprep.subr.bf16.mxu0 0
        %612 = vmatpush2.bf16.msra.mxu0 0
        %613 = vmatprep.subr.bf16.mxu0 0
        %614 = vmatpush2.bf16.msra.mxu0 0
        %615 = vmatprep.mubr.bf16.mxu0 0
        %616 = vmatmul.mubr.bf16.gmra.mxu0 %v327
        %v617 = vpop.f32.mrf.mxu0
        %v618 = vadd.f32 %v373, %v617
        %v619 = vpop.f32.mrf.mxu0
        %v620 = vadd.f32 %v377, %v619
        %v621 = vpop.f32.mrf.mxu0
        %v622 = vpop.f32.mrf.mxu0
        %623 = vdwg.mxu0
        %v624 = vxor.u32 %v577, 2147483648
        %v625 = vxor.u32 %v579, 2147483648
        %v626 = vxor.u32 %v618, 2147483648
        %v627 = vxor.u32 %v620, 2147483648
        %v628 = vmul.f32 %v624, 1.442695
        %v629 = vpow.pop %v628
        %v630 = vmul.f32 %v625, 1.442695
        %v631 = vpow.pop %v630
        %v632 = vmul.f32 %v626, 1.442695
        %v633 = vpow.pop %v632
        %v634 = vmul.f32 %v627, 1.442695
        %v635 = vpow.pop %v634
        %v636 = vadd.f32 %v629, 1.0
        %v637 = vadd.f32 %v631, 1.0
        %v638 = vadd.f32 %v633, 1.0
        %v639 = vadd.f32 %v635, 1.0
        %v640 = vrcp.pop %v636
        %v641 = vmul.f32 1.0, %v640
        %v642 = vrcp.pop %v637
        %v643 = vmul.f32 1.0, %v642
        %v644 = vrcp.pop %v638
        %v645 = vmul.f32 1.0, %v644
        %v646 = vrcp.pop %v639
        %v647 = vmul.f32 1.0, %v646
        %v648 = vmul.f32 %v577, %v641
        %v649 = vmul.f32 %v579, %v643
        %v650 = vmul.f32 %v618, %v645
        %v651 = vmul.f32 %v620, %v647
        %v652 = vpack.c.bf16 %v648, %v648
        %v653 = vpack.c.bf16 %v649, %v649
        %v654 = vpack.c.bf16 %v650, %v650
        %v655 = vpack.c.bf16 %v651, %v651
        %v656 = vld [vmem:[%s287] sm:$0xff]
        %v657 = vld [vmem:[%s287 + $0x8] sm:$0xff]
        %v658 = vld [vmem:[%s287 + $0x10] sm:$0xff]
        %v659 = vld [vmem:[%s287 + $0x18] sm:$0xff]
        %v660 = vld [vmem:[%s287 + $0x20] sm:$0xff]
        %v661 = vld [vmem:[%s287 + $0x28] sm:$0xff]
        %v662 = vld [vmem:[%s287 + $0x30] sm:$0xff]
        %v663 = vld [vmem:[%s287 + $0x38] sm:$0xff]
        %v664 = vld [vmem:[%s287 + $0x40] sm:$0xff]
        %v665 = vld [vmem:[%s287 + $0x48] sm:$0xff]
        %v666 = vld [vmem:[%s287 + $0x50] sm:$0xff]
        %v667 = vld [vmem:[%s287 + $0x58] sm:$0xff]
        %v668 = vld [vmem:[%s287 + $0x60] sm:$0xff]
        %v669 = vld [vmem:[%s287 + $0x68] sm:$0xff]
        %v670 = vld [vmem:[%s287 + $0x70] sm:$0xff]
        %v671 = vld [vmem:[%s287 + $0x78] sm:$0xff]
        %v672 = vld [vmem:[%s287 + $0x80] sm:$0xff]
        %v673 = vld [vmem:[%s287 + $0x88] sm:$0xff]
        %v674 = vld [vmem:[%s287 + $0x90] sm:$0xff]
        %v675 = vld [vmem:[%s287 + $0x98] sm:$0xff]
        %v676 = vld [vmem:[%s287 + $0xa0] sm:$0xff]
        %v677 = vld [vmem:[%s287 + $0xa8] sm:$0xff]
        %v678 = vld [vmem:[%s287 + $0xb0] sm:$0xff]
        %v679 = vld [vmem:[%s287 + $0xb8] sm:$0xff]
        %v680 = vld [vmem:[%s287 + $0xc0] sm:$0xff]
        %v681 = vld [vmem:[%s287 + $0xc8] sm:$0xff]
        %v682 = vld [vmem:[%s287 + $0xd0] sm:$0xff]
        %v683 = vld [vmem:[%s287 + $0xd8] sm:$0xff]
        %v684 = vld [vmem:[%s287 + $0xe0] sm:$0xff]
        %v685 = vld [vmem:[%s287 + $0xe8] sm:$0xff]
        %v686 = vld [vmem:[%s287 + $0xf0] sm:$0xff]
        %v687 = vld [vmem:[%s287 + $0xf8] sm:$0xff]
        %v688 = vld [vmem:[%s287 + $0x100] sm:$0xff]
        %v689 = vld [vmem:[%s287 + $0x108] sm:$0xff]
        %v690 = vld [vmem:[%s287 + $0x110] sm:$0xff]
        %v691 = vld [vmem:[%s287 + $0x118] sm:$0xff]
        %v692 = vld [vmem:[%s287 + $0x120] sm:$0xff]
        %v693 = vld [vmem:[%s287 + $0x128] sm:$0xff]
        %v694 = vld [vmem:[%s287 + $0x130] sm:$0xff]
        %v695 = vld [vmem:[%s287 + $0x138] sm:$0xff]
        %v696 = vld [vmem:[%s287 + $0x140] sm:$0xff]
        %v697 = vld [vmem:[%s287 + $0x148] sm:$0xff]
        %v698 = vld [vmem:[%s287 + $0x150] sm:$0xff]
        %v699 = vld [vmem:[%s287 + $0x158] sm:$0xff]
        %v700 = vld [vmem:[%s287 + $0x160] sm:$0xff]
        %v701 = vld [vmem:[%s287 + $0x168] sm:$0xff]
        %v702 = vld [vmem:[%s287 + $0x170] sm:$0xff]
        %v703 = vld [vmem:[%s287 + $0x178] sm:$0xff]
        %v704 = vld [vmem:[%s287 + $0x180] sm:$0xff]
        %v705 = vld [vmem:[%s287 + $0x188] sm:$0xff]
        %v706 = vld [vmem:[%s287 + $0x190] sm:$0xff]
        %v707 = vld [vmem:[%s287 + $0x198] sm:$0xff]
        %v708 = vld [vmem:[%s287 + $0x1a0] sm:$0xff]
        %v709 = vld [vmem:[%s287 + $0x1a8] sm:$0xff]
        %v710 = vld [vmem:[%s287 + $0x1b0] sm:$0xff]
        %v711 = vld [vmem:[%s287 + $0x1b8] sm:$0xff]
        %v712 = vld [vmem:[%s287 + $0x1c0] sm:$0xff]
        %v713 = vld [vmem:[%s287 + $0x1c8] sm:$0xff]
        %v714 = vld [vmem:[%s287 + $0x1d0] sm:$0xff]
        %v715 = vld [vmem:[%s287 + $0x1d8] sm:$0xff]
        %v716 = vld [vmem:[%s287 + $0x1e0] sm:$0xff]
        %v717 = vld [vmem:[%s287 + $0x1e8] sm:$0xff]
        %v718 = vld [vmem:[%s287 + $0x1f0] sm:$0xff]
        %v719 = vld [vmem:[%s287 + $0x1f8] sm:$0xff]
        %v720 = vld [vmem:[%s322] sm:$0x3]
        %v722 = vlaneseq
        %v723 = vshrl.u32 %v722, 7
        %v724 = vsub.s32 0, %v723
        %v725 = vrot.slane %v720, %v724
        %v726 = vlaneseq
        %v727 = vshrl.u32 %v726, 7
        %v728 = vsub.s32 1, %v727
        %v729 = vrot.slane %v720, %v728
        %v796 = vunpack.c.l.b16 %v656
        %v797 = vunpack.c.h.b16 %v656
        %v798 = vunpack.c.l.b16 %v657
        %v799 = vunpack.c.h.b16 %v657
        %v800 = vunpack.c.l.b16 %v658
        %v801 = vunpack.c.h.b16 %v658
        %v802 = vunpack.c.l.b16 %v659
        %v803 = vunpack.c.h.b16 %v659
        %v804 = vunpack.c.l.b16 %v660
        %v805 = vunpack.c.h.b16 %v660
        %v806 = vunpack.c.l.b16 %v661
        %v807 = vunpack.c.h.b16 %v661
        %v808 = vunpack.c.l.b16 %v662
        %v809 = vunpack.c.h.b16 %v662
        %v810 = vunpack.c.l.b16 %v663
        %v811 = vunpack.c.h.b16 %v663
        %v812 = vunpack.c.l.b16 %v664
        %v813 = vunpack.c.h.b16 %v664
        %v814 = vunpack.c.l.b16 %v665
        %v815 = vunpack.c.h.b16 %v665
        %v816 = vunpack.c.l.b16 %v666
        %v817 = vunpack.c.h.b16 %v666
        %v818 = vunpack.c.l.b16 %v667
        %v819 = vunpack.c.h.b16 %v667
        %v820 = vunpack.c.l.b16 %v668
        %v821 = vunpack.c.h.b16 %v668
        %v822 = vunpack.c.l.b16 %v669
        %v823 = vunpack.c.h.b16 %v669
        %v824 = vunpack.c.l.b16 %v670
        %v825 = vunpack.c.h.b16 %v670
        %v826 = vunpack.c.l.b16 %v671
        %v827 = vunpack.c.h.b16 %v671
        %v828 = vunpack.c.l.b16 %v672
        %v829 = vunpack.c.h.b16 %v672
        %v830 = vunpack.c.l.b16 %v673
        %v831 = vunpack.c.h.b16 %v673
        %v832 = vunpack.c.l.b16 %v674
        %v833 = vunpack.c.h.b16 %v674
        %v834 = vunpack.c.l.b16 %v675
        %v835 = vunpack.c.h.b16 %v675
        %v836 = vunpack.c.l.b16 %v676
        %v837 = vunpack.c.h.b16 %v676
        %v838 = vunpack.c.l.b16 %v677
        %v839 = vunpack.c.h.b16 %v677
        %v840 = vunpack.c.l.b16 %v678
        %v841 = vunpack.c.h.b16 %v678
        %v842 = vunpack.c.l.b16 %v679
        %v843 = vunpack.c.h.b16 %v679
        %v844 = vunpack.c.l.b16 %v680
        %v845 = vunpack.c.h.b16 %v680
        %v846 = vunpack.c.l.b16 %v681
        %v847 = vunpack.c.h.b16 %v681
        %v848 = vunpack.c.l.b16 %v682
        %v849 = vunpack.c.h.b16 %v682
        %v850 = vunpack.c.l.b16 %v683
        %v851 = vunpack.c.h.b16 %v683
        %v852 = vunpack.c.l.b16 %v684
        %v853 = vunpack.c.h.b16 %v684
        %v854 = vunpack.c.l.b16 %v685
        %v855 = vunpack.c.h.b16 %v685
        %v856 = vunpack.c.l.b16 %v686
        %v857 = vunpack.c.h.b16 %v686
        %v858 = vunpack.c.l.b16 %v687
        %v859 = vunpack.c.h.b16 %v687
        %v860 = vunpack.c.l.b16 %v688
        %v861 = vunpack.c.h.b16 %v688
        %v862 = vunpack.c.l.b16 %v689
        %v863 = vunpack.c.h.b16 %v689
        %v864 = vunpack.c.l.b16 %v690
        %v865 = vunpack.c.h.b16 %v690
        %v866 = vunpack.c.l.b16 %v691
        %v867 = vunpack.c.h.b16 %v691
        %v868 = vunpack.c.l.b16 %v692
        %v869 = vunpack.c.h.b16 %v692
        %v870 = vunpack.c.l.b16 %v693
        %v871 = vunpack.c.h.b16 %v693
        %v872 = vunpack.c.l.b16 %v694
        %v873 = vunpack.c.h.b16 %v694
        %v874 = vunpack.c.l.b16 %v695
        %v875 = vunpack.c.h.b16 %v695
        %v876 = vunpack.c.l.b16 %v696
        %v877 = vunpack.c.h.b16 %v696
        %v878 = vunpack.c.l.b16 %v697
        %v879 = vunpack.c.h.b16 %v697
        %v880 = vunpack.c.l.b16 %v698
        %v881 = vunpack.c.h.b16 %v698
        %v882 = vunpack.c.l.b16 %v699
        %v883 = vunpack.c.h.b16 %v699
        %v884 = vunpack.c.l.b16 %v700
        %v885 = vunpack.c.h.b16 %v700
        %v886 = vunpack.c.l.b16 %v701
        %v887 = vunpack.c.h.b16 %v701
        %v888 = vunpack.c.l.b16 %v702
        %v889 = vunpack.c.h.b16 %v702
        %v890 = vunpack.c.l.b16 %v703
        %v891 = vunpack.c.h.b16 %v703
        %v892 = vunpack.c.l.b16 %v704
        %v893 = vunpack.c.h.b16 %v704
        %v894 = vunpack.c.l.b16 %v705
        %v895 = vunpack.c.h.b16 %v705
        %v896 = vunpack.c.l.b16 %v706
        %v897 = vunpack.c.h.b16 %v706
        %v898 = vunpack.c.l.b16 %v707
        %v899 = vunpack.c.h.b16 %v707
        %v900 = vunpack.c.l.b16 %v708
        %v901 = vunpack.c.h.b16 %v708
        %v902 = vunpack.c.l.b16 %v709
        %v903 = vunpack.c.h.b16 %v709
        %v904 = vunpack.c.l.b16 %v710
        %v905 = vunpack.c.h.b16 %v710
        %v906 = vunpack.c.l.b16 %v711
        %v907 = vunpack.c.h.b16 %v711
        %v908 = vunpack.c.l.b16 %v712
        %v909 = vunpack.c.h.b16 %v712
        %v910 = vunpack.c.l.b16 %v713
        %v911 = vunpack.c.h.b16 %v713
        %v912 = vunpack.c.l.b16 %v714
        %v913 = vunpack.c.h.b16 %v714
        %v914 = vunpack.c.l.b16 %v715
        %v915 = vunpack.c.h.b16 %v715
        %v916 = vunpack.c.l.b16 %v716
        %v917 = vunpack.c.h.b16 %v716
        %v918 = vunpack.c.l.b16 %v717
        %v919 = vunpack.c.h.b16 %v717
        %v920 = vunpack.c.l.b16 %v718
        %v921 = vunpack.c.h.b16 %v718
        %v922 = vunpack.c.l.b16 %v719
        %v923 = vunpack.c.h.b16 %v719
        %v924 = vpack.c.b16 %v798, %v796
        %v925 = vpack.c.b16 %v799, %v797
        %v926 = vpack.c.b16 %v802, %v800
        %v927 = vpack.c.b16 %v803, %v801
        %v928 = vpack.c.b16 %v806, %v804
        %v929 = vpack.c.b16 %v807, %v805
        %v930 = vpack.c.b16 %v810, %v808
        %v931 = vpack.c.b16 %v811, %v809
        %v932 = vpack.c.b16 %v814, %v812
        %v933 = vpack.c.b16 %v815, %v813
        %v934 = vpack.c.b16 %v818, %v816
        %v935 = vpack.c.b16 %v819, %v817
        %v936 = vpack.c.b16 %v822, %v820
        %v937 = vpack.c.b16 %v823, %v821
        %v938 = vpack.c.b16 %v826, %v824
        %v939 = vpack.c.b16 %v827, %v825
        %v940 = vpack.c.b16 %v830, %v828
        %v941 = vpack.c.b16 %v831, %v829
        %v942 = vpack.c.b16 %v834, %v832
        %v943 = vpack.c.b16 %v835, %v833
        %v944 = vpack.c.b16 %v838, %v836
        %v945 = vpack.c.b16 %v839, %v837
        %v946 = vpack.c.b16 %v842, %v840
        %v947 = vpack.c.b16 %v843, %v841
        %v948 = vpack.c.b16 %v846, %v844
        %v949 = vpack.c.b16 %v847, %v845
        %v950 = vpack.c.b16 %v850, %v848
        %v951 = vpack.c.b16 %v851, %v849
        %v952 = vpack.c.b16 %v854, %v852
        %v953 = vpack.c.b16 %v855, %v853
        %v954 = vpack.c.b16 %v858, %v856
        %v955 = vpack.c.b16 %v859, %v857
        %v956 = vpack.c.b16 %v862, %v860
        %v957 = vpack.c.b16 %v863, %v861
        %v958 = vpack.c.b16 %v866, %v864
        %v959 = vpack.c.b16 %v867, %v865
        %v960 = vpack.c.b16 %v870, %v868
        %v961 = vpack.c.b16 %v871, %v869
        %v962 = vpack.c.b16 %v874, %v872
        %v963 = vpack.c.b16 %v875, %v873
        %v964 = vpack.c.b16 %v878, %v876
        %v965 = vpack.c.b16 %v879, %v877
        %v966 = vpack.c.b16 %v882, %v880
        %v967 = vpack.c.b16 %v883, %v881
        %v968 = vpack.c.b16 %v886, %v884
        %v969 = vpack.c.b16 %v887, %v885
        %v970 = vpack.c.b16 %v890, %v888
        %v971 = vpack.c.b16 %v891, %v889
        %v972 = vpack.c.b16 %v894, %v892
        %v973 = vpack.c.b16 %v895, %v893
        %v974 = vpack.c.b16 %v898, %v896
        %v975 = vpack.c.b16 %v899, %v897
        %v976 = vpack.c.b16 %v902, %v900
        %v977 = vpack.c.b16 %v903, %v901
        %v978 = vpack.c.b16 %v906, %v904
        %v979 = vpack.c.b16 %v907, %v905
        %v980 = vpack.c.b16 %v910, %v908
        %v981 = vpack.c.b16 %v911, %v909
        %v982 = vpack.c.b16 %v914, %v912
        %v983 = vpack.c.b16 %v915, %v913
        %v984 = vpack.c.b16 %v918, %v916
        %v985 = vpack.c.b16 %v919, %v917
        %v986 = vpack.c.b16 %v922, %v920
        %v987 = vpack.c.b16 %v923, %v921
        %1052 = vmatprep.subr.bf16.mxu0 %v939
        %1053 = vmatpush1.bf16.msra.mxu0 %v938
        %1054 = vmatprep.subr.bf16.mxu0 %v937
        %1055 = vmatpush1.bf16.msra.mxu0 %v936
        %1056 = vmatprep.subr.bf16.mxu0 %v935
        %1057 = vmatpush1.bf16.msra.mxu0 %v934
        %1058 = vmatprep.subr.bf16.mxu0 %v933
        %1059 = vmatpush1.bf16.msra.mxu0 %v932
        %1060 = vmatprep.subr.bf16.mxu0 %v931
        %1061 = vmatpush1.bf16.msra.mxu0 %v930
        %1062 = vmatprep.subr.bf16.mxu0 %v929
        %1063 = vmatpush1.bf16.msra.mxu0 %v928
        %1064 = vmatprep.subr.bf16.mxu0 %v927
        %1065 = vmatpush1.bf16.msra.mxu0 %v926
        %1066 = vmatprep.subr.bf16.mxu0 %v925
        %1067 = vmatpush1.bf16.msra.mxu0 %v924
        %1068 = vmatprep.subr.bf16.mxu0 %v955
        %1069 = vmatpush2.bf16.msra.mxu0 %v954
        %1070 = vmatprep.subr.bf16.mxu0 %v953
        %1071 = vmatpush2.bf16.msra.mxu0 %v952
        %1072 = vmatprep.subr.bf16.mxu0 %v951
        %1073 = vmatpush2.bf16.msra.mxu0 %v950
        %1074 = vmatprep.subr.bf16.mxu0 %v949
        %1075 = vmatpush2.bf16.msra.mxu0 %v948
        %1076 = vmatprep.subr.bf16.mxu0 %v947
        %1077 = vmatpush2.bf16.msra.mxu0 %v946
        %1078 = vmatprep.subr.bf16.mxu0 %v945
        %1079 = vmatpush2.bf16.msra.mxu0 %v944
        %1080 = vmatprep.subr.bf16.mxu0 %v943
        %1081 = vmatpush2.bf16.msra.mxu0 %v942
        %1082 = vmatprep.subr.bf16.mxu0 %v941
        %1083 = vmatpush2.bf16.msra.mxu0 %v940
        %1084 = vmatprep.mubr.bf16.mxu0 %v653
        %1085 = vmatmul.mubr.bf16.gmra.mxu0 %v652
        %v1086 = vpop.f32.mrf.mxu0
        %v1087 = vadd.f32 %v725, %v1086
        %v1088 = vpop.f32.mrf.mxu0
        %v1089 = vadd.f32 %v729, %v1088
        %v1090 = vpop.f32.mrf.mxu0
        %v1091 = vpop.f32.mrf.mxu0
        %1092 = vdwg.mxu0
        %1093 = vmatprep.subr.bf16.mxu0 %v971
        %1094 = vmatpush1.bf16.msra.mxu0 %v970
        %1095 = vmatprep.subr.bf16.mxu0 %v969
        %1096 = vmatpush1.bf16.msra.mxu0 %v968
        %1097 = vmatprep.subr.bf16.mxu0 %v967
        %1098 = vmatpush1.bf16.msra.mxu0 %v966
        %1099 = vmatprep.subr.bf16.mxu0 %v965
        %1100 = vmatpush1.bf16.msra.mxu0 %v964
        %1101 = vmatprep.subr.bf16.mxu0 %v963
        %1102 = vmatpush1.bf16.msra.mxu0 %v962
        %1103 = vmatprep.subr.bf16.mxu0 %v961
        %1104 = vmatpush1.bf16.msra.mxu0 %v960
        %1105 = vmatprep.subr.bf16.mxu0 %v959
        %1106 = vmatpush1.bf16.msra.mxu0 %v958
        %1107 = vmatprep.subr.bf16.mxu0 %v957
        %1108 = vmatpush1.bf16.msra.mxu0 %v956
        %1109 = vmatprep.subr.bf16.mxu0 %v987
        %1110 = vmatpush2.bf16.msra.mxu0 %v986
        %1111 = vmatprep.subr.bf16.mxu0 %v985
        %1112 = vmatpush2.bf16.msra.mxu0 %v984
        %1113 = vmatprep.subr.bf16.mxu0 %v983
        %1114 = vmatpush2.bf16.msra.mxu0 %v982
        %1115 = vmatprep.subr.bf16.mxu0 %v981
        %1116 = vmatpush2.bf16.msra.mxu0 %v980
        %1117 = vmatprep.subr.bf16.mxu0 %v979
        %1118 = vmatpush2.bf16.msra.mxu0 %v978
        %1119 = vmatprep.subr.bf16.mxu0 %v977
        %1120 = vmatpush2.bf16.msra.mxu0 %v976
        %1121 = vmatprep.subr.bf16.mxu0 %v975
        %1122 = vmatpush2.bf16.msra.mxu0 %v974
        %1123 = vmatprep.subr.bf16.mxu0 %v973
        %1124 = vmatpush2.bf16.msra.mxu0 %v972
        %1125 = vmatprep.mubr.bf16.mxu0 %v655
        %1126 = vmatmul.mubr.bf16.gmra.mxu0 %v654
        %v1127 = vpop.f32.mrf.mxu0
        %v1128 = vadd.f32 %v1087, %v1127
        %v1129 = vpop.f32.mrf.mxu0
        %v1130 = vadd.f32 %v1089, %v1129
        %v1131 = vpop.f32.mrf.mxu0
        %v1132 = vpop.f32.mrf.mxu0
        %1133 = vdwg.mxu0
        %v1136 = vcombine.low %v1128, %v1130
        %v1138 = vunpack.c.l.s4 1983009808
        %v1139 = vunpack.c.0.s8 %v1138
        %v1140 = vlaneseq
        %v1141 = vshrl.u32 %v1140, 7
        %v1142 = vsub.s32 %v1139, %v1141
        %v1143 = vrot.slane %v1136, %v1142
        %1145 = vst [vmem:[%s317] sm:$0xf] %v1143
        %s1146 = sand.u32 %s166, 1
        %s1147 = scalar_lea.sflag [#allocation4], %s1146
        %s1148 = sand.u32 %s166, 1
        %s1149 = smul.addr %s1148, 4
        %s1150 = scalar_lea.vmem [#allocation10], %s1149
        // Predicated region
        $region57: #{tpu_custom_call.1} parent=39 // pred_check
          %p1151 = pneg %p176
        $region58: #{tpu_custom_call.1} parent=39 // pred_check_branch
          %1153 = sbr.rel (%p1151) target = $region60
        $region59: #{tpu_custom_call.1} parent=39 // pred_region
          %s1154 = smul.u32 2, %s28
          %s1156 = ssub.s32 64, 64
          %1157 = vsyncadd %s1147, %s1156
          %s1158 = smul.addr %s29, 4
          %s1159 = sadd.s32 %s1154, %s1158
          %s1160 = smul.addr %s1159, 32
          %s1161 = scalar_lea.hbm %s5, %s1160
          %s1163 = sshll.u32 %s1150, 4
          %s1164 = int_to_ptr.vmem [resolvable:$true] %s1163
          %1166 = dma.vmem_to_hbm [thread:$0]  %s1164, 64, %s1161, %s1147
        $region60: #{tpu_custom_call.1} parent=39 // pred_fallthru
          _
      $region40: #{tpu_custom_call.1} parent=5 // pred_fallthru
        _
      %p1167 = scmp.le.s32.totalorder 2, %s19
      // Predicated region
      $region61: #{tpu_custom_call.1} parent=5 // pred_check
        %p1168 = pneg %p1167
      $region62: #{tpu_custom_call.1} parent=5 // pred_check_branch
        %1170 = sbr.rel (%p1168) target = $region64
      $region63: #{tpu_custom_call.1} parent=5 // pred_region
        %s1171 = ssub.s32 %s19, 2
        // Predicated region
        $region65: #{tpu_custom_call.1} parent=63 // pred_check
          %p1172 = pneg %p182
        $region66: #{tpu_custom_call.1} parent=63 // pred_check_branch
          %1174 = sbr.rel (%p1172) target = $region68
        $region67: #{tpu_custom_call.1} parent=63 // pred_region
          %s1175 = sand.u32 %s167, 1
          %s1176 = scalar_lea.sflag [#allocation4], %s1175
          %s1177 = sand.u32 %s167, 1
          %s1178 = smul.addr %s1177, 4
          %s1179 = scalar_lea.vmem [#allocation10], %s1178
          %1180 = dma.done %s1176, 64
        $region68: #{tpu_custom_call.1} parent=63 // pred_fallthru
          _
      $region64: #{tpu_custom_call.1} parent=5 // pred_fallthru
        _
    $region6: #{tpu_custom_call.1} parent=1 // loop_footer
      %s23 = sadd.s32 1, %s19
    $region7: #{tpu_custom_call.1} parent=1 // loop_footer_branch
      %18 = sbr.rel target = $region3
    $region8: #{tpu_custom_call.1} parent=1 // loop_exit
      _
    %1181 = vsyncpa [#allocation3], 1
    %s1182 = scalar_lea.sflag [#allocation3], 1
    %1183 = vsyncpa %s1182, 1
    %1184 = vsyncpa [#allocation6], 1
    %1185 = vsyncpa [#allocation9], 1
    %s1186 = scalar_lea.sflag [#allocation9], 1
    %1187 = vsyncpa %s1186, 1
    %1188 = vsyncpa [#allocation4], 1
    %s1189 = scalar_lea.sflag [#allocation4], 1
    %1190 = vsyncpa %s1189, 1

</llo_original>
